<compile_context>
chip_gen: v7x
topology: tpu7x:2x2x1
jax: 0.10.0
libtpu: 0.0.40
codegen_flags: <defaults>
</compile_context>

<pallas_src>
import jax
import jax.numpy as jnp
from jax import lax
from jax.experimental import pallas as pl
from jax.experimental.pallas import tpu as pltpu

C = 61  # number of spectral channels (hard-coded in the PyTorch forward loop)


def _make_channel_loss_kernel(hw_total, tile_hw, needs_mask):
    """Build the kernel body for a given (static) tiling configuration."""
    n_full = tile_hw // 128      # number of full 128-lane chunks per tile
    rem = tile_hw % 128          # ragged tail (only when tile_hw == full H*W)

    def kernel(pred_ref, tgt_ref, out_ref):
        i = pl.program_id(1)     # spatial-tile index (reduction axis)

        @pl.when(i == 0)
        def _():
            out_ref[...] = jnp.zeros_like(out_ref)

        diff = jnp.abs(pred_ref[...].astype(jnp.float32)
                       - tgt_ref[...].astype(jnp.float32))        # (C, tile_hw)

        if needs_mask:
            # Last tile may extend past H*W (Pallas pads boundary blocks with
            # unspecified values); zero those lanes before accumulating.
            lane = lax.broadcasted_iota(jnp.int32, diff.shape, 1)
            remaining = hw_total - i * tile_hw
            diff = jnp.where(lane < remaining, diff, 0.0)

        # Lane-wise accumulation into the (C, 128) output block: plain VPU
        # vadds with full-lane stores; cross-lane reduce happens in JAX later.
        if n_full:
            acc = out_ref[...]
            for j in range(n_full):
                acc = acc + diff[:, j * 128:(j + 1) * 128]
            out_ref[...] = acc
        if rem:
            out_ref[:, :rem] += diff[:, n_full * 128:]

    return kernel


def channel_loss(pred, target, channel_weights, *, max_tile_hw=8192):
    """pred, target: (B, C, H, W) arrays; channel_weights: (C,)."""
    B, Cin, H, W = pred.shape
    assert Cin == C, f"expected {C} channels, got {Cin}"
    HW = H * W

    # Free, contiguous reshape — no HBM relayout.
    pred_r = pred.reshape(B, C, HW)
    tgt_r = target.reshape(B, C, HW)

    if HW <= max_tile_hw:
        tile_hw = HW                 # full spatial extent -> single tile per b
        n_hw = 1
        needs_mask = False
    else:
        tile_hw = max(128, (max_tile_hw // 128) * 128)
        n_hw = pl.cdiv(HW, tile_hw)
        needs_mask = (HW % tile_hw) != 0

    kernel = _make_channel_loss_kernel(HW, tile_hw, needs_mask)

    itemsize = jnp.dtype(pred.dtype).itemsize
    cost = pl.CostEstimate(
        flops=3 * B * C * HW,
        transcendentals=0,
        bytes_accessed=2 * B * C * HW * itemsize + B * C * 128 * 4,
    )

    partial = pl.pallas_call(
        kernel,
        out_shape=jax.ShapeDtypeStruct((B, C, 128), jnp.float32),
        grid_spec=pltpu.PrefetchScalarGridSpec(
            num_scalar_prefetch=0,
            grid=(B, n_hw),
            in_specs=[
                pl.BlockSpec((None, C, tile_hw), lambda b, i: (b, 0, i)),
                pl.BlockSpec((None, C, tile_hw), lambda b, i: (b, 0, i)),
            ],
            out_specs=pl.BlockSpec((None, C, 128), lambda b, i: (b, 0, 0)),
        ),
        compiler_params=pltpu.CompilerParams(
            dimension_semantics=("parallel", "arbitrary"),
        ),
        cost_estimate=cost,
    )(pred_r, tgt_r)

    # Finish tiny reduction in plain JAX: per-channel mean, weight, mean over C.
    per_channel_sum = jnp.sum(partial, axis=(0, 2))            # (C,)
    per_channel_l1 = per_channel_sum / jnp.float32(B * HW)     # (C,)
    w = channel_weights.astype(jnp.float32)
    return jnp.mean(per_channel_l1 * w)


def channel_loss_ref(pred, target, channel_weights):
    """Plain-JAX reference matching the PyTorch forward (default flags)."""
    diff = jnp.abs(pred.astype(jnp.float32) - target.astype(jnp.float32))
    per_channel = jnp.mean(diff, axis=(0, 2, 3))               # (C,)
    return jnp.mean(per_channel * channel_weights.astype(jnp.float32))


# TODO(synk): enable_sam=True path (SpectralAngleMapper) and dynamic_weight
# regularization are not implemented; defaults in __init__ disable both
# (reg == 0 at init anyway since |w.sum() - w_sum| == 0).

if __name__ == "__main__":
    key = jax.random.PRNGKey(0)
    k1, k2, k3, k4 = jax.random.split(key, 4)

    # deterministic channel weights (shape (61,), as the module's __init__ implies)
    channel_weights = 0.5 + jnp.arange(C, dtype=jnp.float32) / C

    def check(pred, target, **kw):
        out = jax.block_until_ready(channel_loss(pred, target, channel_weights, **kw))
        ref = channel_loss_ref(pred, target, channel_weights)
        assert jnp.allclose(out, ref, rtol=1e-5, atol=1e-6), (out, ref)

    # 1) Main case: single full-spatial tile per batch element.
    B, H, W = 2, 16, 16
    pred = jax.random.normal(k1, (B, C, H, W), dtype=jnp.float32)
    target = jax.random.normal(k2, (B, C, H, W), dtype=jnp.float32)
    check(pred, target)

    # 2) Multi-tile accumulation path (HW split into 128-lane tiles).
    check(pred, target, max_tile_hw=128)

    # 3) Ragged last tile -> in-kernel tail masking path.
    pred3 = jax.random.normal(k3, (2, C, 16, 20), dtype=jnp.float32)
    target3 = jax.random.normal(k4, (2, C, 16, 20), dtype=jnp.float32)
    check(pred3, target3, max_tile_hw=128)

    # 4) Single tile whose lane width is not a multiple of 128.
    check(pred3[:, :, :12, :12], target3[:, :, :12, :12])

    print("KERNEL_OK")
</pallas_src>

<mosaic_0001>
module attributes {stable_mosaic.version = 11 : i64} {
  func.func @kernel(%arg0: i32, %arg1: i32, %arg2: memref<1x61x256xf32, #tpu.memory_space<vmem>>, %arg3: memref<1x61x256xf32, #tpu.memory_space<vmem>>, %arg4: memref<1x61x128xf32, #tpu.memory_space<vmem>>) attributes {dimension_semantics = [#tpu.dimension_semantics<parallel>, #tpu.dimension_semantics<arbitrary>], iteration_bounds = array<i64: 2, 1>, scalar_prefetch = 0 : i64, scratch_operands = 0 : i64, tpu.core_type = #tpu.core_type<tc>, window_params = [{transform_indices = @transform_0, window_bounds = array<i64: 1, 61, 256>}, {transform_indices = @transform_1, window_bounds = array<i64: 1, 61, 256>}, {transform_indices = @transform_2, window_bounds = array<i64: 1, 61, 128>}]} {
    %c0_i32 = arith.constant 0 : i32
    %0 = arith.cmpi eq, %arg1, %c0_i32 : i32
    %1 = arith.extui %0 : i1 to i32
    %c0_i32_0 = arith.constant 0 : i32
    %2 = arith.cmpi ne, %1, %c0_i32_0 : i32
    scf.if %2 {
      %cst = arith.constant 0.000000e+00 : f32
      %18 = vector.broadcast %cst : f32 to vector<61x128xf32>
      %c0_12 = arith.constant 0 : index
      %c0_13 = arith.constant 0 : index
      %c0_14 = arith.constant 0 : index
      %19 = vector.load %arg4[%c0_12, %c0_13, %c0_14] : memref<1x61x128xf32, #tpu.memory_space<vmem>>, vector<1x61x128xf32>
      %20 = vector.shape_cast %19 : vector<1x61x128xf32> to vector<61x128xf32>
      %21 = vector.shape_cast %18 : vector<61x128xf32> to vector<1x61x128xf32>
      tpu.vector_store %arg4[%c0_12, %c0_13, %c0_14], %21 {strides = array<i32>} : memref<1x61x128xf32, #tpu.memory_space<vmem>>, vector<1x61x128xf32>,
    } else {
    }
    %c0 = arith.constant 0 : index
    %c0_1 = arith.constant 0 : index
    %c0_2 = arith.constant 0 : index
    %3 = vector.load %arg2[%c0, %c0_1, %c0_2] : memref<1x61x256xf32, #tpu.memory_space<vmem>>, vector<1x61x256xf32>
    %4 = vector.shape_cast %3 : vector<1x61x256xf32> to vector<61x256xf32>
    %c0_3 = arith.constant 0 : index
    %c0_4 = arith.constant 0 : index
    %c0_5 = arith.constant 0 : index
    %5 = vector.load %arg3[%c0_3, %c0_4, %c0_5] : memref<1x61x256xf32, #tpu.memory_space<vmem>>, vector<1x61x256xf32>
    %6 = vector.shape_cast %5 : vector<1x61x256xf32> to vector<61x256xf32>
    %7 = arith.subf %4, %6 : vector<61x256xf32>
    %8 = math.absf %7 : vector<61x256xf32>
    %c0_6 = arith.constant 0 : index
    %c0_7 = arith.constant 0 : index
    %c0_8 = arith.constant 0 : index
    %9 = vector.load %arg4[%c0_6, %c0_7, %c0_8] : memref<1x61x128xf32, #tpu.memory_space<vmem>>, vector<1x61x128xf32>
    %10 = vector.shape_cast %9 : vector<1x61x128xf32> to vector<61x128xf32>
    %11 = vector.extract_strided_slice %8 {offsets = [0, 0], sizes = [61, 128], strides = [1, 1]} : vector<61x256xf32> to vector<61x128xf32>
    %12 = arith.addf %10, %11 : vector<61x128xf32>
    %13 = vector.extract_strided_slice %8 {offsets = [0, 128], sizes = [61, 128], strides = [1, 1]} : vector<61x256xf32> to vector<61x128xf32>
    %14 = arith.addf %12, %13 : vector<61x128xf32>
    %c0_9 = arith.constant 0 : index
    %c0_10 = arith.constant 0 : index
    %c0_11 = arith.constant 0 : index
    %15 = vector.load %arg4[%c0_9, %c0_10, %c0_11] : memref<1x61x128xf32, #tpu.memory_space<vmem>>, vector<1x61x128xf32>
    %16 = vector.shape_cast %15 : vector<1x61x128xf32> to vector<61x128xf32>
    %17 = vector.shape_cast %14 : vector<61x128xf32> to vector<1x61x128xf32>
    tpu.vector_store %arg4[%c0_9, %c0_10, %c0_11], %17 {strides = array<i32>} : memref<1x61x128xf32, #tpu.memory_space<vmem>>, vector<1x61x128xf32>,
    return
  }
  func.func @transform_0(%arg0: i32, %arg1: i32) -> (i32, i32, i32) {
    %c0_i32 = arith.constant 0 : i32
    %c0_i32_0 = arith.constant 0 : i32
    return %arg0, %c0_i32, %arg1 : i32, i32, i32
  }
  func.func @transform_1(%arg0: i32, %arg1: i32) -> (i32, i32, i32) {
    %c0_i32 = arith.constant 0 : i32
    %c0_i32_0 = arith.constant 0 : i32
    return %arg0, %c0_i32, %arg1 : i32, i32, i32
  }
  func.func @transform_2(%arg0: i32, %arg1: i32) -> (i32, i32, i32) {
    %c0_i32 = arith.constant 0 : i32
    %c0_i32_0 = arith.constant 0 : i32
    %c0_i32_1 = arith.constant 0 : i32
    return %arg0, %c0_i32, %c0_i32_0 : i32, i32, i32
  }
}

</mosaic_0001>

<llo_original>
// kernel: tpu_custom_call.1
$region0: #{tpu_custom_call.1}
  #allocation0 [shape = 'u32[]', space=smem, size = 0x4, offset = 0x4, fixed_abs, tag = 'smem constant byte address 0x4 - core index']
  #allocation1 [shape = 'u32[144,128]{1,0:T(1,128)}', space=vmem, size = 0x12000, scoped, tag = 'internal scratch']
  %s0 = inlined_call_operand.vmem [shape: f32[2,61,256], index: 0, kind: input, shape index: {}]
  %s1 = inlined_call_operand.vmem [shape: f32[2,61,256], index: 1, kind: input, shape index: {}]
  %s2 = inlined_call_operand.vmem [shape: f32[2,61,128], index: 2, kind: output, shape index: {}]
  %s3 = sld [smem:[#allocation0]]
  $region45: #{tpu_custom_call.1} parent=0
    _
  %s5 = ssub.s32 1, %s3
  %s6 = scalar_select 0, %s5, %s3
  loop: start=0, step=1, limit=4
  $region2: #{tpu_custom_call.1} parent=0 // loop_pre_header
    _
  $region3: #{tpu_custom_call.1} parent=0 // loop_header
    %s8 = sphi 0, %s12
    %p9 = scmp.ge.s32.totalorder %s8, 4
    %s15 = sphi 0, %s27
    %s16 = sphi 0, %s23
    %s17 = sphi 0, %s15
    %s18 = sphi 0, %s16
    %s19 = sphi 0, %s17
    %s20 = sphi 0, %s18
    %s32 = sphi 0, %s34
    %s35 = sphi 0, %s32
    %s36 = sphi 0, %s35
    %s52 = sphi 0, %s36
    %s60 = sphi 0, %s62
    %s63 = sphi 0, %s60
    %s64 = sphi 0, %s63
    %s80 = sphi 0, %s64
    %s86 = sphi 0, %s88
    %s89 = sphi 0, %s86
    %s90 = sphi 0, %s89
    %s106 = sphi 0, %s90
  $region4: #{tpu_custom_call.1} parent=0 // loop_header_branch
    %11 = sbr.rel (%p9) target = $region8
  $region5: #{tpu_custom_call.1} parent=0 // loop_body
    %s13 = ssub.s32 %s8, 1
    %s14 = ssub.s32 %s8, 2
    %s21 = sadd.s32 1, %s16
    %p22 = scmp.ge.s32.totalorder %s21, 1
    %s23 = scalar_select %p22, 0, %s21
    %s24 = sadd.s32 1, %s15
    %s25 = scalar_select %p22, %s24, %s15
    %p26 = scmp.ge.s32.totalorder %s25, 2
    %s27 = scalar_select %p26, 0, %s25
    %s28 = ssub.s32 %s15, %s27
    %s29 = ssub.s32 %s16, %s23
    %s30 = sor.u32 %s28, %s29
    %p31 = scmp.eq.s32.totalorder %s30, 0
    %s33 = sadd.s32 %s32, 1
    %s34 = scalar_select %p31, %s32, %s33
    %p37 = pneg %p31
    %p38 = scmp.eq.s32.totalorder %s8, 1
    %p39 = por %p37, %p38
    %p40 = scmp.ne.s32.totalorder %s32, %s35
    %p41 = scmp.eq.s32.totalorder %s8, 0
    %p42 = por %p40, %p41
    %p43 = scmp.ne.s32.totalorder %s32, %s35
    %p44 = scmp.eq.s32.totalorder %s13, 1
    %p45 = por %p43, %p44
    %p46 = scmp.ne.s32.totalorder %s35, %s36
    %p47 = scmp.eq.s32.totalorder %s13, 0
    %p48 = por %p46, %p47
    %p49 = scmp.ne.s32.totalorder %s35, %s36
    %p50 = scmp.eq.s32.totalorder %s14, 1
    %p51 = por %p49, %p50
    %p53 = scmp.ne.s32.totalorder %s36, %s52
    %p54 = scmp.eq.s32.totalorder %s14, 0
    %p55 = por %p53, %p54
    %s56 = ssub.s32 %s15, %s27
    %s57 = ssub.s32 %s16, %s23
    %s58 = sor.u32 %s56, %s57
    %p59 = scmp.eq.s32.totalorder %s58, 0
    %s61 = sadd.s32 %s60, 1
    %s62 = scalar_select %p59, %s60, %s61
    %p65 = pneg %p59
    %p66 = scmp.eq.s32.totalorder %s8, 1
    %p67 = por %p65, %p66
    %p68 = scmp.ne.s32.totalorder %s60, %s63
    %p69 = scmp.eq.s32.totalorder %s8, 0
    %p70 = por %p68, %p69
    %p71 = scmp.ne.s32.totalorder %s60, %s63
    %p72 = scmp.eq.s32.totalorder %s13, 1
    %p73 = por %p71, %p72
    %p74 = scmp.ne.s32.totalorder %s63, %s64
    %p75 = scmp.eq.s32.totalorder %s13, 0
    %p76 = por %p74, %p75
    %p77 = scmp.ne.s32.totalorder %s63, %s64
    %p78 = scmp.eq.s32.totalorder %s14, 1
    %p79 = por %p77, %p78
    %p81 = scmp.ne.s32.totalorder %s64, %s80
    %p82 = scmp.eq.s32.totalorder %s14, 0
    %p83 = por %p81, %p82
    %s84 = ssub.s32 %s15, %s27
    %p85 = scmp.eq.s32.totalorder %s84, 0
    %s87 = sadd.s32 %s86, 1
    %s88 = scalar_select %p85, %s86, %s87
    %p91 = pneg %p85
    %p92 = scmp.eq.s32.totalorder %s8, 1
    %p93 = por %p91, %p92
    %p94 = scmp.ne.s32.totalorder %s86, %s89
    %p95 = scmp.eq.s32.totalorder %s8, 0
    %p96 = por %p94, %p95
    %p97 = scmp.ne.s32.totalorder %s86, %s89
    %p98 = scmp.eq.s32.totalorder %s13, 1
    %p99 = por %p97, %p98
    %p100 = scmp.ne.s32.totalorder %s89, %s90
    %p101 = scmp.eq.s32.totalorder %s13, 0
    %p102 = por %p100, %p101
    %p103 = scmp.ne.s32.totalorder %s89, %s90
    %p104 = scmp.eq.s32.totalorder %s14, 1
    %p105 = por %p103, %p104
    %p107 = scmp.ne.s32.totalorder %s90, %s106
    %p108 = scmp.eq.s32.totalorder %s14, 0
    %p109 = por %p107, %p108
    %p110 = scmp.le.s32.totalorder 1, %s8
    %p111 = scmp.lt.s32.totalorder %s8, 3
    %p112 = pnand %p110, %p111
    %p113 = pneg %p112
    // Predicated region
    $region9: #{tpu_custom_call.1} parent=5 // pred_check
      _
    $region10: #{tpu_custom_call.1} parent=5 // pred_check_branch
      %115 = sbr.rel (%p112) target = $region12
    $region11: #{tpu_custom_call.1} parent=5 // pred_region
      %s116 = ssub.s32 %s8, 1
    $region12: #{tpu_custom_call.1} parent=5 // pred_fallthru
      _
    %p117 = scmp.lt.s32.totalorder %s8, 2
    // Predicated region
    $region13: #{tpu_custom_call.1} parent=5 // pred_check
      %p118 = pneg %p117
    $region14: #{tpu_custom_call.1} parent=5 // pred_check_branch
      %120 = sbr.rel (%p118) target = $region16
    $region15: #{tpu_custom_call.1} parent=5 // pred_region
      // Predicated region
      $region17: #{tpu_custom_call.1} parent=15 // pred_check
        %p121 = pneg %p42
      $region18: #{tpu_custom_call.1} parent=15 // pred_check_branch
        %123 = sbr.rel (%p121) target = $region20
      $region19: #{tpu_custom_call.1} parent=15 // pred_region
        %s124 = smul.u32 2, %s16
        %p125 = scmp.lt.s32.totalorder %s15, 1
        %s126 = scalar_select %p125, %s15, 1
        %p127 = scmp.lt.s32.totalorder %s124, 1
        %s128 = scalar_select %p127, %s124, 1
        %s129 = smul.addr %s126, 16
        %s130 = sadd.s32 %s128, %s129
        %s131 = smul.addr %s130, 8
        %s132 = scalar_lea.vmem %s0, %s131
        %s133 = smul.u32 2, %s16
      $region20: #{tpu_custom_call.1} parent=15 // pred_fallthru
        _
      // Predicated region
      $region21: #{tpu_custom_call.1} parent=15 // pred_check
        %p134 = pneg %p70
      $region22: #{tpu_custom_call.1} parent=15 // pred_check_branch
        %136 = sbr.rel (%p134) target = $region24
      $region23: #{tpu_custom_call.1} parent=15 // pred_region
        %s137 = smul.u32 2, %s16
        %p138 = scmp.lt.s32.totalorder %s15, 1
        %s139 = scalar_select %p138, %s15, 1
        %p140 = scmp.lt.s32.totalorder %s137, 1
        %s141 = scalar_select %p140, %s137, 1
        %s142 = smul.addr %s139, 16
        %s143 = sadd.s32 %s141, %s142
        %s144 = smul.addr %s143, 8
        %s145 = scalar_lea.vmem %s1, %s144
        %s146 = smul.u32 2, %s16
      $region24: #{tpu_custom_call.1} parent=15 // pred_fallthru
        _
    $region16: #{tpu_custom_call.1} parent=5 // pred_fallthru
      _
    %p147 = scmp.le.s32.totalorder 1, %s8
    %p148 = scmp.lt.s32.totalorder %s8, 3
    %p149 = pnand %p147, %p148
    %p150 = pneg %p149
    // Predicated region
    $region25: #{tpu_custom_call.1} parent=5 // pred_check
      _
    $region26: #{tpu_custom_call.1} parent=5 // pred_check_branch
      %152 = sbr.rel (%p149) target = $region28
    $region27: #{tpu_custom_call.1} parent=5 // pred_region
      %s153 = ssub.s32 %s8, 1
      %s154 = smul.u32 2, %s18
      %p155 = scmp.lt.s32.totalorder %s17, 1
      %s156 = scalar_select %p155, %s17, 1
      %p157 = scmp.lt.s32.totalorder %s154, 1
      %s158 = scalar_select %p157, %s154, 1
      %s159 = smul.addr %s156, 16
      %s160 = sadd.s32 %s158, %s159
      %s161 = smul.addr %s160, 8
      %s162 = scalar_lea.vmem %s0, %s161
      %p163 = pneg %p48
      %p164 = pneg %p45
      %s165 = smul.u32 2, %s18
      %p166 = scmp.lt.s32.totalorder %s17, 1
      %s167 = scalar_select %p166, %s17, 1
      %p168 = scmp.lt.s32.totalorder %s165, 1
      %s169 = scalar_select %p168, %s165, 1
      %s170 = smul.addr %s167, 16
      %s171 = sadd.s32 %s169, %s170
      %s172 = smul.addr %s171, 8
      %s173 = scalar_lea.vmem %s1, %s172
      %p174 = pneg %p76
      %p175 = pneg %p73
      %p176 = pneg %p102
      %p177 = pneg %p99
      %p178 = scmp.lt.s32.totalorder %s17, 1
      %s179 = scalar_select %p178, %s17, 1
      %s180 = smul.addr %s179, 8
      %s181 = smul.addr %s180, 8
      %s182 = scalar_lea.vmem %s2, %s181
      %s183 = smul.u32 2, %s18
      %p184 = scmp.lt.s32.totalorder %s17, 1
      %s185 = scalar_select %p184, %s17, 1
      %p186 = scmp.lt.s32.totalorder %s183, 1
      %s187 = scalar_select %p186, %s183, 1
      %s188 = smul.addr %s185, 16
      %s189 = sadd.s32 %s187, %s188
      %s190 = smul.addr %s189, 8
      %s191 = scalar_lea.vmem %s0, %s190
      %s192 = smul.u32 2, %s18
      %s193 = smul.u32 2, %s18
      %p194 = scmp.lt.s32.totalorder %s17, 1
      %s195 = scalar_select %p194, %s17, 1
      %p196 = scmp.lt.s32.totalorder %s193, 1
      %s197 = scalar_select %p196, %s193, 1
      %s198 = smul.addr %s195, 16
      %s199 = sadd.s32 %s197, %s198
      %s200 = smul.addr %s199, 8
      %s201 = scalar_lea.vmem %s1, %s200
      %s202 = smul.u32 2, %s18
      %p203 = scmp.lt.s32.totalorder %s17, 1
      %s204 = scalar_select %p203, %s17, 1
      %s205 = smul.addr %s204, 8
      %s206 = smul.addr %s205, 8
      %s207 = scalar_lea.vmem %s2, %s206
      %p208 = scmp.eq.s32.totalorder %s18, 0
      // Predicated region
      $region29: #{tpu_custom_call.1} parent=27 // pred_check
        %p209 = pneg %p208
      $region30: #{tpu_custom_call.1} parent=27 // pred_check_branch
        %211 = sbr.rel (%p209) target = $region32
      $region31: #{tpu_custom_call.1} parent=27 // pred_region
        %212 = vst [vmem:[%s207] sm:$0xff] 0.0
        %213 = vst [vmem:[%s207 + $0x8] sm:$0xff] 0.0
        %214 = vst [vmem:[%s207 + $0x10] sm:$0xff] 0.0
        %215 = vst [vmem:[%s207 + $0x18] sm:$0xff] 0.0
        %216 = vst [vmem:[%s207 + $0x20] sm:$0xff] 0.0
        %217 = vst [vmem:[%s207 + $0x28] sm:$0xff] 0.0
        %218 = vst [vmem:[%s207 + $0x30] sm:$0xff] 0.0
        %219 = vst [vmem:[%s207 + $0x38] sm:$0x1f] 0.0
      $region32: #{tpu_custom_call.1} parent=27 // pred_fallthru
        _
      %v220 = vld [vmem:[%s191] sm:$0xff]
      %v221 = vld [vmem:[%s191 + $0x8] sm:$0xff]
      %v222 = vld [vmem:[%s191 + $0x10] sm:$0xff]
      %v223 = vld [vmem:[%s191 + $0x18] sm:$0xff]
      %v224 = vld [vmem:[%s191 + $0x20] sm:$0xff]
      %v225 = vld [vmem:[%s191 + $0x28] sm:$0xff]
      %v226 = vld [vmem:[%s191 + $0x30] sm:$0xff]
      %v227 = vld [vmem:[%s191 + $0x38] sm:$0xff]
      %v228 = vld [vmem:[%s191 + $0x40] sm:$0xff]
      %v229 = vld [vmem:[%s191 + $0x48] sm:$0xff]
      %v230 = vld [vmem:[%s191 + $0x50] sm:$0xff]
      %v231 = vld [vmem:[%s191 + $0x58] sm:$0xff]
      %v232 = vld [vmem:[%s191 + $0x60] sm:$0xff]
      %v233 = vld [vmem:[%s191 + $0x68] sm:$0xff]
      %v234 = vld [vmem:[%s191 + $0x70] sm:$0x1f]
      %v235 = vld [vmem:[%s191 + $0x78] sm:$0x1f]
      %v236 = vld [vmem:[%s201] sm:$0xff]
      %v237 = vld [vmem:[%s201 + $0x8] sm:$0xff]
      %v238 = vld [vmem:[%s201 + $0x10] sm:$0xff]
      %v239 = vld [vmem:[%s201 + $0x18] sm:$0xff]
      %v240 = vld [vmem:[%s201 + $0x20] sm:$0xff]
      %v241 = vld [vmem:[%s201 + $0x28] sm:$0xff]
      %v242 = vld [vmem:[%s201 + $0x30] sm:$0xff]
      %v243 = vld [vmem:[%s201 + $0x38] sm:$0xff]
      %v244 = vld [vmem:[%s201 + $0x40] sm:$0xff]
      %v245 = vld [vmem:[%s201 + $0x48] sm:$0xff]
      %v246 = vld [vmem:[%s201 + $0x50] sm:$0xff]
      %v247 = vld [vmem:[%s201 + $0x58] sm:$0xff]
      %v248 = vld [vmem:[%s201 + $0x60] sm:$0xff]
      %v249 = vld [vmem:[%s201 + $0x68] sm:$0xff]
      %v250 = vld [vmem:[%s201 + $0x70] sm:$0x1f]
      %v251 = vld [vmem:[%s201 + $0x78] sm:$0x1f]
      %v252 = vsub.f32 %v220, %v236
      %v253 = vsub.f32 %v221, %v237
      %v254 = vsub.f32 %v222, %v238
      %v255 = vsub.f32 %v223, %v239
      %v256 = vsub.f32 %v224, %v240
      %v257 = vsub.f32 %v225, %v241
      %v258 = vsub.f32 %v226, %v242
      %v259 = vsub.f32 %v227, %v243
      %v260 = vsub.f32 %v228, %v244
      %v261 = vsub.f32 %v229, %v245
      %v262 = vsub.f32 %v230, %v246
      %v263 = vsub.f32 %v231, %v247
      %v264 = vsub.f32 %v232, %v248
      %v265 = vsub.f32 %v233, %v249
      %v266 = vsub.f32 %v234, %v250
      %v267 = vsub.f32 %v235, %v251
      %v268 = vand.u32 2147483647, %v252
      %v269 = vand.u32 2147483647, %v253
      %v270 = vand.u32 2147483647, %v254
      %v271 = vand.u32 2147483647, %v255
      %v272 = vand.u32 2147483647, %v256
      %v273 = vand.u32 2147483647, %v257
      %v274 = vand.u32 2147483647, %v258
      %v275 = vand.u32 2147483647, %v259
      %v276 = vand.u32 2147483647, %v260
      %v277 = vand.u32 2147483647, %v261
      %v278 = vand.u32 2147483647, %v262
      %v279 = vand.u32 2147483647, %v263
      %v280 = vand.u32 2147483647, %v264
      %v281 = vand.u32 2147483647, %v265
      %v282 = vand.u32 2147483647, %v266
      %v283 = vand.u32 2147483647, %v267
      %v284 = vld [vmem:[%s207] sm:$0xff]
      %v285 = vld [vmem:[%s207 + $0x8] sm:$0xff]
      %v286 = vld [vmem:[%s207 + $0x10] sm:$0xff]
      %v287 = vld [vmem:[%s207 + $0x18] sm:$0xff]
      %v288 = vld [vmem:[%s207 + $0x20] sm:$0xff]
      %v289 = vld [vmem:[%s207 + $0x28] sm:$0xff]
      %v290 = vld [vmem:[%s207 + $0x30] sm:$0xff]
      %v291 = vld [vmem:[%s207 + $0x38] sm:$0x1f]
      %v292 = vadd.f32 %v284, %v268
      %v293 = vadd.f32 %v285, %v270
      %v294 = vadd.f32 %v286, %v272
      %v295 = vadd.f32 %v287, %v274
      %v296 = vadd.f32 %v288, %v276
      %v297 = vadd.f32 %v289, %v278
      %v298 = vadd.f32 %v290, %v280
      %v299 = vadd.f32 %v291, %v282
      %v300 = vadd.f32 %v292, %v269
      %v301 = vadd.f32 %v293, %v271
      %v302 = vadd.f32 %v294, %v273
      %v303 = vadd.f32 %v295, %v275
      %v304 = vadd.f32 %v296, %v277
      %v305 = vadd.f32 %v297, %v279
      %v306 = vadd.f32 %v298, %v281
      %v307 = vadd.f32 %v299, %v283
      %308 = vst [vmem:[%s207] sm:$0xff] %v300
      %309 = vst [vmem:[%s207 + $0x8] sm:$0xff] %v301
      %310 = vst [vmem:[%s207 + $0x10] sm:$0xff] %v302
      %311 = vst [vmem:[%s207 + $0x18] sm:$0xff] %v303
      %312 = vst [vmem:[%s207 + $0x20] sm:$0xff] %v304
      %313 = vst [vmem:[%s207 + $0x28] sm:$0xff] %v305
      %314 = vst [vmem:[%s207 + $0x30] sm:$0xff] %v306
      %315 = vst [vmem:[%s207 + $0x38] sm:$0x1f] %v307
      %p316 = scmp.lt.s32.totalorder %s17, 1
      %s317 = scalar_select %p316, %s17, 1
      %s318 = smul.addr %s317, 8
      %s319 = smul.addr %s318, 8
      %s320 = scalar_lea.vmem %s2, %s319
      // Predicated region
      $region33: #{tpu_custom_call.1} parent=27 // pred_check
        %p321 = pneg %p99
      $region34: #{tpu_custom_call.1} parent=27 // pred_check_branch
        %323 = sbr.rel (%p321) target = $region36
      $region35: #{tpu_custom_call.1} parent=27 // pred_region
        _
      $region36: #{tpu_custom_call.1} parent=27 // pred_fallthru
        _
    $region28: #{tpu_custom_call.1} parent=5 // pred_fallthru
      _
    %p324 = scmp.le.s32.totalorder 2, %s8
    // Predicated region
    $region37: #{tpu_custom_call.1} parent=5 // pred_check
      %p325 = pneg %p324
    $region38: #{tpu_custom_call.1} parent=5 // pred_check_branch
      %327 = sbr.rel (%p325) target = $region40
    $region39: #{tpu_custom_call.1} parent=5 // pred_region
      %s328 = ssub.s32 %s8, 2
      // Predicated region
      $region41: #{tpu_custom_call.1} parent=39 // pred_check
        %p329 = pneg %p105
      $region42: #{tpu_custom_call.1} parent=39 // pred_check_branch
        %331 = sbr.rel (%p329) target = $region44
      $region43: #{tpu_custom_call.1} parent=39 // pred_region
        %p332 = scmp.lt.s32.totalorder %s19, 1
        %s333 = scalar_select %p332, %s19, 1
        %s334 = smul.addr %s333, 8
        %s335 = smul.addr %s334, 8
        %s336 = scalar_lea.vmem %s2, %s335
      $region44: #{tpu_custom_call.1} parent=39 // pred_fallthru
        _
    $region40: #{tpu_custom_call.1} parent=5 // pred_fallthru
      _
  $region6: #{tpu_custom_call.1} parent=0 // loop_footer
    %s12 = sadd.s32 1, %s8
  $region7: #{tpu_custom_call.1} parent=0 // loop_footer_branch
    %7 = sbr.rel target = $region3
  $region8: #{tpu_custom_call.1} parent=0 // loop_exit
    _

</llo_original>
